<compile_context>
chip_gen: v6e
topology: v6e:2x2x1
jax: 0.10.0
libtpu: 0.0.40
codegen_flags: <defaults>
</compile_context>

<pallas_src>
import jax
import jax.numpy as jnp
from jax.experimental import pallas as pl
from jax.experimental.pallas import tpu as pltpu

EPS = 1e-5


def _loan_kernel(x_ref,
                 w1_ref, b1_ref,
                 w2_ref, b2_ref,
                 w3_ref, b3_ref,
                 w4_ref, b4_ref,
                 o_ref):
    """relu(x@W1+b1) -> relu(@W2'+b2') -> relu(@W3'+b3') -> fc4 lane reduce."""

    def fused_layer(h, w_ref, b_ref, out_dtype):
        # bf16 x bf16 on the MXU with f32 accumulation; bias add + ReLU on the
        # VPU (BN scale/shift already folded into W'/b' in the wrapper).
        y = jnp.dot(h, w_ref[...], preferred_element_type=jnp.float32) + b_ref[...]
        return jnp.maximum(y, 0.0).astype(out_dtype)

    h = x_ref[...].astype(jnp.bfloat16)                # (bt, in); no-op if x is bf16
    h = fused_layer(h, w1_ref, b1_ref, jnp.bfloat16)   # (bt, 512) bf16 spill
    h = fused_layer(h, w2_ref, b2_ref, jnp.bfloat16)   # (bt, 256) bf16 spill
    h = fused_layer(h, w3_ref, b3_ref, jnp.float32)    # (bt, 32)  feeds reduce, f32

    # fc4 has a single output feature: cross-lane reduce (XLU) instead of a
    # 1-column MXU matmul.  w4_ref is the (1, 32) row diag(s3) @ W4.
    o_ref[...] = (jnp.sum(h * w4_ref[...], axis=-1, keepdims=True)
                  + b4_ref[...]).astype(o_ref.dtype)


def loan_approval_forward(x, prep, *, block_b=2048):
    """x: (B, input_size) f32 or bf16; prep: dict from prepare_params()."""
    B, in_f = x.shape

    # Batch tile: as large as block_b allows, but capped at cdiv(B, 2) so the
    # "parallel" grid axis has >= 2 tiles for v7x's two TensorCores; rounded
    # up to a multiple of 8 sublanes.  Intermediates at bt=2048 are ~7 MiB,
    # comfortably under the scoped-VMEM default on v5e/v6e/v7x.
    bt = min(block_b, B, -(-B // 2))
    bt = max(8, ((bt + 7) // 8) * 8)

    weight_ops = (
        prep["w1"], prep["b1"],
        prep["w2"], prep["b2"],
        prep["w3"], prep["b3"],
        prep["w4"], prep["b4"],
    )

    def resident_spec(arr):
        # Constant index_map -> the block index never changes across the batch
        # grid, so each parameter tile is DMA'd once and stays VMEM-resident.
        return pl.BlockSpec(arr.shape, lambda i: (0, 0))

    return pl.pallas_call(
        _loan_kernel,
        out_shape=jax.ShapeDtypeStruct((B, 1), jnp.float32),
        grid_spec=pltpu.PrefetchScalarGridSpec(
            num_scalar_prefetch=0,
            grid=(pl.cdiv(B, bt),),
            in_specs=[pl.BlockSpec((bt, in_f), lambda i: (i, 0))]
                     + [resident_spec(a) for a in weight_ops],
            out_specs=pl.BlockSpec((bt, 1), lambda i: (i, 0)),
        ),
        compiler_params=pltpu.CompilerParams(
            # Batch tiles are independent -> let the two TCs on v7x split them.
            dimension_semantics=("parallel",)),
    )(x, *weight_ops)


def init_params(key, input_size):
    """Synthetic parameters with the PyTorch module's shapes.

    Linear weights stored (in, out); biases / BN vectors stored (1, out).
    BN gamma/beta and running mean/var are randomized to exercise the fold
    (a freshly constructed PyTorch module has gamma=1, beta=0, mean=0, var=1).
    """
    dims = [(input_size, 512), (512, 256), (256, 32), (32, 1)]
    params = {}
    keys = jax.random.split(key, 20)
    ki = 0
    for idx, (din, dout) in enumerate(dims, start=1):
        bound = 1.0 / float(din) ** 0.5
        params[f"w{idx}"] = jax.random.uniform(
            keys[ki], (din, dout), jnp.float32, -bound, bound); ki += 1
        params[f"b{idx}"] = jax.random.uniform(
            keys[ki], (1, dout), jnp.float32, -bound, bound); ki += 1
        if idx <= 3:
            params[f"g{idx}"] = jax.random.uniform(
                keys[ki], (1, dout), jnp.float32, 0.5, 1.5); ki += 1
            params[f"be{idx}"] = 0.1 * jax.random.normal(
                keys[ki], (1, dout), jnp.float32); ki += 1
            params[f"m{idx}"] = 0.1 * jax.random.normal(
                keys[ki], (1, dout), jnp.float32); ki += 1
            params[f"v{idx}"] = jax.random.uniform(
                keys[ki], (1, dout), jnp.float32, 0.5, 1.5); ki += 1
    return params


def prepare_params(p):
    """One-time prep: fold eval-mode BN into the NEXT layer's weights/bias and
    cast matmul weights to bf16.

        bn(y) = y * s + t,  s = g / sqrt(v + eps),  t = beta - mean * s
        bn(y) @ Wn + bn_bias = y @ (diag(s) Wn) + (t @ Wn + bn_bias)

    The fold is exact (no ReLU/scale commutation needed, sign-independent),
    computed in f32, then cast once.
    """
    def bn_fold(idx):
        s = p[f"g{idx}"] / jnp.sqrt(p[f"v{idx}"] + EPS)   # (1, N)
        t = p[f"be{idx}"] - p[f"m{idx}"] * s              # (1, N)
        return s, t

    s1, t1 = bn_fold(1)
    s2, t2 = bn_fold(2)
    s3, t3 = bn_fold(3)

    prep = {}
    prep["w1"] = p["w1"].astype(jnp.bfloat16)                        # (in, 512)
    prep["b1"] = p["b1"]                                             # (1, 512)
    prep["w2"] = (s1.T * p["w2"]).astype(jnp.bfloat16)               # (512, 256)
    prep["b2"] = p["b2"] + t1 @ p["w2"]                              # (1, 256)
    prep["w3"] = (s2.T * p["w3"]).astype(jnp.bfloat16)               # (256, 32)
    prep["b3"] = p["b3"] + t2 @ p["w3"]                              # (1, 32)
    prep["w4"] = (s3 * p["w4"].reshape(1, -1)).astype(jnp.float32)   # (1, 32) row
    prep["b4"] = p["b4"].reshape(1, 1) + t3 @ p["w4"]                # (1, 1)
    return prep


def reference_forward_folded(x, prep):
    """Pure-JAX mirror of the kernel (folded params, bf16 matmuls, f32 acc)."""
    h = x.astype(jnp.bfloat16)
    for i in (1, 2, 3):
        y = jnp.dot(h, prep[f"w{i}"],
                    preferred_element_type=jnp.float32) + prep[f"b{i}"]
        h = jnp.maximum(y, 0.0)
        if i < 3:
            h = h.astype(jnp.bfloat16)
    return jnp.sum(h * prep["w4"], axis=-1, keepdims=True) + prep["b4"]


def reference_forward_f32(x, p):
    """Full-f32, unfolded eval-mode PyTorch forward (semantic check).

    The kernel uses bf16 matmul inputs, so this comparison uses a loose
    tolerance; the tight check is against the precision-matched folded ref.
    """
    def layer(h, w, b, g, be, m, v):
        y = jnp.maximum(jnp.dot(h, w) + b, 0.0)
        return (y - m) / jnp.sqrt(v + EPS) * g + be

    h = layer(x, p["w1"], p["b1"], p["g1"], p["be1"], p["m1"], p["v1"])
    h = layer(h, p["w2"], p["b2"], p["g2"], p["be2"], p["m2"], p["v2"])
    h = layer(h, p["w3"], p["b3"], p["g3"], p["be3"], p["m3"], p["v3"])
    return jnp.dot(h, p["w4"]) + p["b4"]


if __name__ == "__main__":
    INPUT_SIZE = 32

    key = jax.random.PRNGKey(0)
    kp, k1, k2, k3 = jax.random.split(key, 4)
    raw_params = init_params(kp, INPUT_SIZE)
    prep_params = prepare_params(raw_params)

    def check(x, block_b):
        out = jax.block_until_ready(
            loan_approval_forward(x, prep_params, block_b=block_b))
        assert out.shape == (x.shape[0], 1)
        ref_k = reference_forward_folded(x, prep_params)   # kernel-matched precision
        ref_f = reference_forward_f32(x, raw_params)       # true f32 eval-mode forward
        assert jnp.allclose(out, ref_k, atol=2e-3, rtol=2e-3), \
            float(jnp.max(jnp.abs(out - ref_k)))
        assert jnp.allclose(out, ref_f, atol=5e-2, rtol=5e-2), \
            float(jnp.max(jnp.abs(out - ref_f)))

    # Small single-tile check (batch = 8).
    check(jax.random.normal(k1, (8, INPUT_SIZE), jnp.float32), block_b=8)

    # Default tiling: B=1024 with block_b=2048 -> bt capped to 512, grid of 2
    # "parallel" tiles (both v7x TCs get work); weights stay VMEM-resident.
    check(jax.random.normal(k2, (1024, INPUT_SIZE), jnp.float32), block_b=2048)

    # Ragged last tile: B=100 -> bt=56, grid of 2 with a padded final tile
    # (padded rows compute garbage that Pallas never writes back).
    check(jax.random.normal(k3, (100, INPUT_SIZE), jnp.float32), block_b=512)

    print("KERNEL_OK")
</pallas_src>

<mosaic_0001>
module attributes {stable_mosaic.version = 11 : i64} {
  func.func @_loan_kernel(%arg0: i32, %arg1: memref<8x32xf32, #tpu.memory_space<vmem>>, %arg2: memref<32x512xbf16, #tpu.memory_space<vmem>>, %arg3: memref<1x512xf32, #tpu.memory_space<vmem>>, %arg4: memref<512x256xbf16, #tpu.memory_space<vmem>>, %arg5: memref<1x256xf32, #tpu.memory_space<vmem>>, %arg6: memref<256x32xbf16, #tpu.memory_space<vmem>>, %arg7: memref<1x32xf32, #tpu.memory_space<vmem>>, %arg8: memref<1x32xf32, #tpu.memory_space<vmem>>, %arg9: memref<1x1xf32, #tpu.memory_space<vmem>>, %arg10: memref<8x1xf32, #tpu.memory_space<vmem>>) attributes {dimension_semantics = [#tpu.dimension_semantics<parallel>], iteration_bounds = array<i64: 1>, scalar_prefetch = 0 : i64, scratch_operands = 0 : i64, tpu.core_type = #tpu.core_type<tc>, window_params = [{transform_indices = @transform_0, window_bounds = array<i64: 8, 32>}, {pipeline_mode = #tpu.pipeline_mode<synchronous>, transform_indices = @transform_1, window_bounds = array<i64: 32, 512>}, {pipeline_mode = #tpu.pipeline_mode<synchronous>, transform_indices = @transform_2, window_bounds = array<i64: 1, 512>}, {pipeline_mode = #tpu.pipeline_mode<synchronous>, transform_indices = @transform_3, window_bounds = array<i64: 512, 256>}, {pipeline_mode = #tpu.pipeline_mode<synchronous>, transform_indices = @transform_4, window_bounds = array<i64: 1, 256>}, {pipeline_mode = #tpu.pipeline_mode<synchronous>, transform_indices = @transform_5, window_bounds = array<i64: 256, 32>}, {pipeline_mode = #tpu.pipeline_mode<synchronous>, transform_indices = @transform_6, window_bounds = array<i64: 1, 32>}, {pipeline_mode = #tpu.pipeline_mode<synchronous>, transform_indices = @transform_7, window_bounds = array<i64: 1, 32>}, {pipeline_mode = #tpu.pipeline_mode<synchronous>, transform_indices = @transform_8, window_bounds = array<i64: 1, 1>}, {transform_indices = @transform_9, window_bounds = array<i64: 8, 1>}]} {
    %c0 = arith.constant 0 : index
    %c0_0 = arith.constant 0 : index
    %0 = vector.load %arg1[%c0, %c0_0] : memref<8x32xf32, #tpu.memory_space<vmem>>, vector<8x32xf32>
    %1 = arith.truncf %0 : vector<8x32xf32> to vector<8x32xbf16>
    %c0_1 = arith.constant 0 : index
    %c0_2 = arith.constant 0 : index
    %2 = vector.load %arg2[%c0_1, %c0_2] : memref<32x512xbf16, #tpu.memory_space<vmem>>, vector<32x512xbf16>
    %cst = arith.constant dense<0.000000e+00> : vector<8x512xf32>
    %3 = tpu.matmul %1, %2, %cst {dimension_numbers = #tpu.dot_dimension_numbers<[1], [0], [0], [1], [0, 0, 1, 1], [], []>} : vector<8x32xbf16>, vector<32x512xbf16>, vector<8x512xf32> -> vector<8x512xf32>
    %c0_3 = arith.constant 0 : index
    %c0_4 = arith.constant 0 : index
    %4 = vector.load %arg3[%c0_3, %c0_4] : memref<1x512xf32, #tpu.memory_space<vmem>>, vector<1x512xf32>
    %5 = vector.broadcast %4 : vector<1x512xf32> to vector<8x512xf32>
    %6 = arith.addf %3, %5 : vector<8x512xf32>
    %cst_5 = arith.constant 0.000000e+00 : f32
    %7 = vector.broadcast %cst_5 : f32 to vector<8x512xf32>
    %8 = arith.maximumf %6, %7 : vector<8x512xf32>
    %9 = arith.truncf %8 : vector<8x512xf32> to vector<8x512xbf16>
    %c0_6 = arith.constant 0 : index
    %c0_7 = arith.constant 0 : index
    %10 = vector.load %arg4[%c0_6, %c0_7] : memref<512x256xbf16, #tpu.memory_space<vmem>>, vector<512x256xbf16>
    %cst_8 = arith.constant dense<0.000000e+00> : vector<8x256xf32>
    %11 = tpu.matmul %9, %10, %cst_8 {dimension_numbers = #tpu.dot_dimension_numbers<[1], [0], [0], [1], [0, 0, 1, 1], [], []>} : vector<8x512xbf16>, vector<512x256xbf16>, vector<8x256xf32> -> vector<8x256xf32>
    %c0_9 = arith.constant 0 : index
    %c0_10 = arith.constant 0 : index
    %12 = vector.load %arg5[%c0_9, %c0_10] : memref<1x256xf32, #tpu.memory_space<vmem>>, vector<1x256xf32>
    %13 = vector.broadcast %12 : vector<1x256xf32> to vector<8x256xf32>
    %14 = arith.addf %11, %13 : vector<8x256xf32>
    %cst_11 = arith.constant 0.000000e+00 : f32
    %15 = vector.broadcast %cst_11 : f32 to vector<8x256xf32>
    %16 = arith.maximumf %14, %15 : vector<8x256xf32>
    %17 = arith.truncf %16 : vector<8x256xf32> to vector<8x256xbf16>
    %c0_12 = arith.constant 0 : index
    %c0_13 = arith.constant 0 : index
    %18 = vector.load %arg6[%c0_12, %c0_13] : memref<256x32xbf16, #tpu.memory_space<vmem>>, vector<256x32xbf16>
    %cst_14 = arith.constant dense<0.000000e+00> : vector<8x32xf32>
    %19 = tpu.matmul %17, %18, %cst_14 {dimension_numbers = #tpu.dot_dimension_numbers<[1], [0], [0], [1], [0, 0, 1, 1], [], []>} : vector<8x256xbf16>, vector<256x32xbf16>, vector<8x32xf32> -> vector<8x32xf32>
    %c0_15 = arith.constant 0 : index
    %c0_16 = arith.constant 0 : index
    %20 = vector.load %arg7[%c0_15, %c0_16] : memref<1x32xf32, #tpu.memory_space<vmem>>, vector<1x32xf32>
    %21 = vector.broadcast %20 : vector<1x32xf32> to vector<8x32xf32>
    %22 = arith.addf %19, %21 : vector<8x32xf32>
    %cst_17 = arith.constant 0.000000e+00 : f32
    %23 = vector.broadcast %cst_17 : f32 to vector<8x32xf32>
    %24 = arith.maximumf %22, %23 : vector<8x32xf32>
    %c0_18 = arith.constant 0 : index
    %c0_19 = arith.constant 0 : index
    %25 = vector.load %arg8[%c0_18, %c0_19] : memref<1x32xf32, #tpu.memory_space<vmem>>, vector<1x32xf32>
    %26 = vector.broadcast %25 : vector<1x32xf32> to vector<8x32xf32>
    %27 = arith.mulf %24, %26 : vector<8x32xf32>
    %cst_20 = arith.constant dense<0.000000e+00> : vector<8xf32>
    %28 = vector.multi_reduction <add>, %27, %cst_20 [1] : vector<8x32xf32> to vector<8xf32>
    %29 = vector.shape_cast %28 : vector<8xf32> to vector<8x1xf32>
    %c0_21 = arith.constant 0 : index
    %c0_22 = arith.constant 0 : index
    %30 = vector.load %arg9[%c0_21, %c0_22] : memref<1x1xf32, #tpu.memory_space<vmem>>, vector<1x1xf32>
    %31 = vector.broadcast %30 : vector<1x1xf32> to vector<8x1xf32>
    %32 = arith.addf %29, %31 : vector<8x1xf32>
    %c0_23 = arith.constant 0 : index
    %c0_24 = arith.constant 0 : index
    %33 = vector.load %arg10[%c0_23, %c0_24] : memref<8x1xf32, #tpu.memory_space<vmem>>, vector<8x1xf32>
    tpu.vector_store %arg10[%c0_23, %c0_24], %32 {strides = array<i32>} : memref<8x1xf32, #tpu.memory_space<vmem>>, vector<8x1xf32>,
    return
  }
  func.func @transform_0(%arg0: i32) -> (i32, i32) {
    %c0_i32 = arith.constant 0 : i32
    %c0_i32_0 = arith.constant 0 : i32
    return %arg0, %c0_i32 : i32, i32
  }
  func.func @transform_1(%arg0: i32) -> (i32, i32) {
    %c0_i32 = arith.constant 0 : i32
    %c0_i32_0 = arith.constant 0 : i32
    %c0_i32_1 = arith.constant 0 : i32
    return %c0_i32, %c0_i32_0 : i32, i32
  }
  func.func @transform_2(%arg0: i32) -> (i32, i32) {
    %c0_i32 = arith.constant 0 : i32
    %c0_i32_0 = arith.constant 0 : i32
    %c0_i32_1 = arith.constant 0 : i32
    return %c0_i32, %c0_i32_0 : i32, i32
  }
  func.func @transform_3(%arg0: i32) -> (i32, i32) {
    %c0_i32 = arith.constant 0 : i32
    %c0_i32_0 = arith.constant 0 : i32
    %c0_i32_1 = arith.constant 0 : i32
    return %c0_i32, %c0_i32_0 : i32, i32
  }
  func.func @transform_4(%arg0: i32) -> (i32, i32) {
    %c0_i32 = arith.constant 0 : i32
    %c0_i32_0 = arith.constant 0 : i32
    %c0_i32_1 = arith.constant 0 : i32
    return %c0_i32, %c0_i32_0 : i32, i32
  }
  func.func @transform_5(%arg0: i32) -> (i32, i32) {
    %c0_i32 = arith.constant 0 : i32
    %c0_i32_0 = arith.constant 0 : i32
    %c0_i32_1 = arith.constant 0 : i32
    return %c0_i32, %c0_i32_0 : i32, i32
  }
  func.func @transform_6(%arg0: i32) -> (i32, i32) {
    %c0_i32 = arith.constant 0 : i32
    %c0_i32_0 = arith.constant 0 : i32
    %c0_i32_1 = arith.constant 0 : i32
    return %c0_i32, %c0_i32_0 : i32, i32
  }
  func.func @transform_7(%arg0: i32) -> (i32, i32) {
    %c0_i32 = arith.constant 0 : i32
    %c0_i32_0 = arith.constant 0 : i32
    %c0_i32_1 = arith.constant 0 : i32
    return %c0_i32, %c0_i32_0 : i32, i32
  }
  func.func @transform_8(%arg0: i32) -> (i32, i32) {
    %c0_i32 = arith.constant 0 : i32
    %c0_i32_0 = arith.constant 0 : i32
    %c0_i32_1 = arith.constant 0 : i32
    return %c0_i32, %c0_i32_0 : i32, i32
  }
  func.func @transform_9(%arg0: i32) -> (i32, i32) {
    %c0_i32 = arith.constant 0 : i32
    %c0_i32_0 = arith.constant 0 : i32
    return %arg0, %c0_i32 : i32, i32
  }
}

</mosaic_0001>

<llo_original>
// kernel: tpu_custom_call.1
$region0: #{tpu_custom_call.1}
  #allocation0 [shape = 'u32[]', space=smem, size = 0x4, offset = 0x4, fixed_abs, tag = 'smem constant byte address 0x4 - core index']
  #allocation1 [shape = 'u32[144,128]{1,0:T(1,128)}', space=vmem, size = 0x12000, scoped, tag = 'internal scratch']
  #allocation2 [shape = 'f32[1,1]{1,0:T(1,128)S(1)}', space=vmem, size = 0x200, scoped, tag = 'scoped memory for tpu_custom_call.1']
  %s0 = inlined_call_operand.vmem [shape: f32[8,32], index: 0, kind: input, shape index: {}]
  %s1 = inlined_call_operand.vmem [shape: bf16[32,512], index: 1, kind: input, shape index: {}]
  %s2 = inlined_call_operand.vmem [shape: f32[1,512], index: 2, kind: input, shape index: {}]
  %s3 = inlined_call_operand.hbm [shape: bf16[512,256], index: 3, kind: input, shape index: {}]
  %s4 = inlined_call_operand.vmem [shape: f32[1,256], index: 4, kind: input, shape index: {}]
  %s5 = inlined_call_operand.vmem [shape: bf16[256,32], index: 5, kind: input, shape index: {}]
  %s6 = inlined_call_operand.vmem [shape: f32[1,32], index: 6, kind: input, shape index: {}]
  %s7 = inlined_call_operand.vmem [shape: f32[1,32], index: 7, kind: input, shape index: {}]
  %s8 = inlined_call_operand.<no memory space> [shape: f32[1,1], index: 8, kind: input, shape index: {}]
  %s9 = inlined_call_operand.vmem [shape: f32[8,1], index: 9, kind: output, shape index: {}]
  %s10 = sld [smem:[#allocation0]]
  $region50: #{tpu_custom_call.1} parent=0
    _
  %s12 = ssub.s32 1, %s10
  %s13 = scalar_select 0, %s12, %s10
  %v14 = vstv %s8
  %15 = vst [vmem:[#allocation2] sm:$0x1] %v14
  $region1: #{tpu_custom_call.1} parent=0
    #allocation3 [shape = 'u8[262144]{0}', space=vmem, size = 0x40000, scoped, tag = 'input window, operand 3, single buffered']
    #allocation4 [shape = 's32[1]{0}', space=sflag, size = 0x4, scoped, tag = 'scoped memory for tpu_custom_call.1']
    %16 = vsyncpa [#allocation4], 0
    // Predicated region
    $region2: #{tpu_custom_call.1} parent=1 // pred_check
      _
    $region3: #{tpu_custom_call.1} parent=1 // pred_check_branch
      %18 = sbr.rel (0) target = $region5
    $region4: #{tpu_custom_call.1} parent=1 // pred_region
      _
    $region5: #{tpu_custom_call.1} parent=1 // pred_fallthru
      _
    // Predicated region
    $region6: #{tpu_custom_call.1} parent=1 // pred_check
      _
    $region7: #{tpu_custom_call.1} parent=1 // pred_check_branch
      %20 = sbr.rel (0) target = $region9
    $region8: #{tpu_custom_call.1} parent=1 // pred_region
      _
    $region9: #{tpu_custom_call.1} parent=1 // pred_fallthru
      _
    // Predicated region
    $region10: #{tpu_custom_call.1} parent=1 // pred_check
      _
    $region11: #{tpu_custom_call.1} parent=1 // pred_check_branch
      %22 = sbr.rel (0) target = $region13
    $region12: #{tpu_custom_call.1} parent=1 // pred_region
      _
    $region13: #{tpu_custom_call.1} parent=1 // pred_fallthru
      _
    // Predicated region
    $region14: #{tpu_custom_call.1} parent=1 // pred_check
      _
    $region15: #{tpu_custom_call.1} parent=1 // pred_check_branch
      %24 = sbr.rel (0) target = $region17
    $region16: #{tpu_custom_call.1} parent=1 // pred_region
      %s26 = ssub.s32 8192, 8192
      %27 = vsyncadd [#allocation4], %s26
      %s28 = sshll.u32 [#allocation3], 4
      %s29 = int_to_ptr.vmem [resolvable:$true] %s28
      %34 = dma.hbm_to_vmem [thread:$0]  %s3, 8192, %s29, [#allocation4], 128, 128, 8
    $region17: #{tpu_custom_call.1} parent=1 // pred_fallthru
      _
    // Predicated region
    $region18: #{tpu_custom_call.1} parent=1 // pred_check
      _
    $region19: #{tpu_custom_call.1} parent=1 // pred_check_branch
      %36 = sbr.rel (0) target = $region21
    $region20: #{tpu_custom_call.1} parent=1 // pred_region
      _
    $region21: #{tpu_custom_call.1} parent=1 // pred_fallthru
      _
    // Predicated region
    $region22: #{tpu_custom_call.1} parent=1 // pred_check
      _
    $region23: #{tpu_custom_call.1} parent=1 // pred_check_branch
      %38 = sbr.rel (0) target = $region25
    $region24: #{tpu_custom_call.1} parent=1 // pred_region
      _
    $region25: #{tpu_custom_call.1} parent=1 // pred_fallthru
      _
    // Predicated region
    $region26: #{tpu_custom_call.1} parent=1 // pred_check
      _
    $region27: #{tpu_custom_call.1} parent=1 // pred_check_branch
      %40 = sbr.rel (0) target = $region29
    $region28: #{tpu_custom_call.1} parent=1 // pred_region
      _
    $region29: #{tpu_custom_call.1} parent=1 // pred_fallthru
      _
    // Predicated region
    $region30: #{tpu_custom_call.1} parent=1 // pred_check
      _
    $region31: #{tpu_custom_call.1} parent=1 // pred_check_branch
      %42 = sbr.rel (0) target = $region33
    $region32: #{tpu_custom_call.1} parent=1 // pred_region
      _
    $region33: #{tpu_custom_call.1} parent=1 // pred_fallthru
      _
    // Predicated region
    $region34: #{tpu_custom_call.1} parent=1 // pred_check
      _
    $region35: #{tpu_custom_call.1} parent=1 // pred_check_branch
      %44 = sbr.rel (0) target = $region37
    $region36: #{tpu_custom_call.1} parent=1 // pred_region
      _
    $region37: #{tpu_custom_call.1} parent=1 // pred_fallthru
      _
    // Predicated region
    $region38: #{tpu_custom_call.1} parent=1 // pred_check
      _
    $region39: #{tpu_custom_call.1} parent=1 // pred_check_branch
      %46 = sbr.rel (0) target = $region41
    $region40: #{tpu_custom_call.1} parent=1 // pred_region
      %47 = dma.done [#allocation4], 8192
    $region41: #{tpu_custom_call.1} parent=1 // pred_fallthru
      _
    %v49 = vld [vmem:[%s0] sm:$0xff]
    %v50 = vpack.c.bf16 %v49, %v49
    %v51 = vld [vmem:[%s1] sm:$0xff]
    %v52 = vld [vmem:[%s1 + $0x8] sm:$0xff]
    %v53 = vld [vmem:[%s1 + $0x10] sm:$0xff]
    %v54 = vld [vmem:[%s1 + $0x18] sm:$0xff]
    %v55 = vld [vmem:[%s1 + $0x20] sm:$0xff]
    %v56 = vld [vmem:[%s1 + $0x28] sm:$0xff]
    %v57 = vld [vmem:[%s1 + $0x30] sm:$0xff]
    %v58 = vld [vmem:[%s1 + $0x38] sm:$0xff]
    %v59 = vld [vmem:[%s2] sm:$0xf]
    %v61 = vlaneseq
    %v62 = vshrl.u32 %v61, 7
    %v63 = vsub.s32 0, %v62
    %v64 = vrot.slane %v59, %v63
    %v65 = vlaneseq
    %v66 = vshrl.u32 %v65, 7
    %v67 = vsub.s32 1, %v66
    %v68 = vrot.slane %v59, %v67
    %v69 = vlaneseq
    %v70 = vshrl.u32 %v69, 7
    %v71 = vsub.s32 2, %v70
    %v72 = vrot.slane %v59, %v71
    %v73 = vlaneseq
    %v74 = vshrl.u32 %v73, 7
    %v75 = vsub.s32 3, %v74
    %v76 = vrot.slane %v59, %v75
    %v89 = vunpack.c.l.b16 %v51
    %v90 = vunpack.c.h.b16 %v51
    %v91 = vunpack.c.l.b16 %v52
    %v92 = vunpack.c.h.b16 %v52
    %v93 = vunpack.c.l.b16 %v53
    %v94 = vunpack.c.h.b16 %v53
    %v95 = vunpack.c.l.b16 %v54
    %v96 = vunpack.c.h.b16 %v54
    %v97 = vunpack.c.l.b16 %v55
    %v98 = vunpack.c.h.b16 %v55
    %v99 = vunpack.c.l.b16 %v56
    %v100 = vunpack.c.h.b16 %v56
    %v101 = vunpack.c.l.b16 %v57
    %v102 = vunpack.c.h.b16 %v57
    %v103 = vunpack.c.l.b16 %v58
    %v104 = vunpack.c.h.b16 %v58
    %v105 = vpack.c.b16 %v93, %v89
    %v106 = vpack.c.b16 %v94, %v90
    %v107 = vpack.c.b16 %v95, %v91
    %v108 = vpack.c.b16 %v96, %v92
    %v109 = vpack.c.b16 %v101, %v97
    %v110 = vpack.c.b16 %v102, %v98
    %v111 = vpack.c.b16 %v103, %v99
    %v112 = vpack.c.b16 %v104, %v100
    %vm121 = vcmask 261120
    %v123 = vsel %vm121, %v50, 0
    %125 = vmatprep.subr.bf16.mxu0 0
    %126 = vmatpush1.bf16.msra.mxu0 0
    %127 = vmatprep.subr.bf16.mxu0 0
    %128 = vmatpush1.bf16.msra.mxu0 0
    %129 = vmatprep.subr.bf16.mxu0 0
    %130 = vmatpush1.bf16.msra.mxu0 0
    %131 = vmatprep.subr.bf16.mxu0 0
    %132 = vmatpush1.bf16.msra.mxu0 0
    %133 = vmatprep.subr.bf16.mxu0 0
    %134 = vmatpush1.bf16.msra.mxu0 0
    %135 = vmatprep.subr.bf16.mxu0 0
    %136 = vmatpush1.bf16.msra.mxu0 0
    %137 = vmatprep.subr.bf16.mxu0 %v110
    %138 = vmatpush1.bf16.msra.mxu0 %v109
    %139 = vmatprep.subr.bf16.mxu0 %v106
    %140 = vmatpush1.bf16.msra.mxu0 %v105
    %141 = vmatprep.subr.bf16.mxu0 0
    %142 = vmatpush2.bf16.msra.mxu0 0
    %143 = vmatprep.subr.bf16.mxu0 0
    %144 = vmatpush2.bf16.msra.mxu0 0
    %145 = vmatprep.subr.bf16.mxu0 0
    %146 = vmatpush2.bf16.msra.mxu0 0
    %147 = vmatprep.subr.bf16.mxu0 0
    %148 = vmatpush2.bf16.msra.mxu0 0
    %149 = vmatprep.subr.bf16.mxu0 0
    %150 = vmatpush2.bf16.msra.mxu0 0
    %151 = vmatprep.subr.bf16.mxu0 0
    %152 = vmatpush2.bf16.msra.mxu0 0
    %153 = vmatprep.subr.bf16.mxu0 0
    %154 = vmatpush2.bf16.msra.mxu0 0
    %155 = vmatprep.subr.bf16.mxu0 0
    %156 = vmatpush2.bf16.msra.mxu0 0
    %157 = vmatprep.mubr.bf16.mxu0 0
    %158 = vmatmul.mubr.bf16.gmra.mxu0 %v123
    %v159 = vpop.f32.mrf.mxu0
    %v160 = vadd.f32 %v64, %v159
    %v161 = vpop.f32.mrf.mxu0
    %v162 = vadd.f32 %v68, %v161
    %v163 = vpop.f32.mrf.mxu0
    %v164 = vpop.f32.mrf.mxu0
    %165 = vdwg.mxu0
    %166 = vmatprep.subr.bf16.mxu0 0
    %167 = vmatpush1.bf16.msra.mxu0 0
    %168 = vmatprep.subr.bf16.mxu0 0
    %169 = vmatpush1.bf16.msra.mxu0 0
    %170 = vmatprep.subr.bf16.mxu0 0
    %171 = vmatpush1.bf16.msra.mxu0 0
    %172 = vmatprep.subr.bf16.mxu0 0
    %173 = vmatpush1.bf16.msra.mxu0 0
    %174 = vmatprep.subr.bf16.mxu0 0
    %175 = vmatpush1.bf16.msra.mxu0 0
    %176 = vmatprep.subr.bf16.mxu0 0
    %177 = vmatpush1.bf16.msra.mxu0 0
    %178 = vmatprep.subr.bf16.mxu0 %v112
    %179 = vmatpush1.bf16.msra.mxu0 %v111
    %180 = vmatprep.subr.bf16.mxu0 %v108
    %181 = vmatpush1.bf16.msra.mxu0 %v107
    %182 = vmatprep.subr.bf16.mxu0 0
    %183 = vmatpush2.bf16.msra.mxu0 0
    %184 = vmatprep.subr.bf16.mxu0 0
    %185 = vmatpush2.bf16.msra.mxu0 0
    %186 = vmatprep.subr.bf16.mxu0 0
    %187 = vmatpush2.bf16.msra.mxu0 0
    %188 = vmatprep.subr.bf16.mxu0 0
    %189 = vmatpush2.bf16.msra.mxu0 0
    %190 = vmatprep.subr.bf16.mxu0 0
    %191 = vmatpush2.bf16.msra.mxu0 0
    %192 = vmatprep.subr.bf16.mxu0 0
    %193 = vmatpush2.bf16.msra.mxu0 0
    %194 = vmatprep.subr.bf16.mxu0 0
    %195 = vmatpush2.bf16.msra.mxu0 0
    %196 = vmatprep.subr.bf16.mxu0 0
    %197 = vmatpush2.bf16.msra.mxu0 0
    %198 = vmatprep.mubr.bf16.mxu0 0
    %199 = vmatmul.mubr.bf16.gmra.mxu0 %v123
    %v200 = vpop.f32.mrf.mxu0
    %v201 = vadd.f32 %v72, %v200
    %v202 = vpop.f32.mrf.mxu0
    %v203 = vadd.f32 %v76, %v202
    %v204 = vpop.f32.mrf.mxu0
    %v205 = vpop.f32.mrf.mxu0
    %206 = vdwg.mxu0
    %v207 = vmax.f32 %v160, 0.0
    %v208 = vmax.f32 %v162, 0.0
    %v209 = vmax.f32 %v201, 0.0
    %v210 = vmax.f32 %v203, 0.0
    %v211 = vpack.c.bf16 %v207, %v207
    %v212 = vpack.c.bf16 %v208, %v208
    %v213 = vpack.c.bf16 %v209, %v209
    %v214 = vpack.c.bf16 %v210, %v210
    %v215 = vld [vmem:[#allocation3] sm:$0xff]
    %v216 = vld [vmem:[#allocation3 + $0x8] sm:$0xff]
    %v217 = vld [vmem:[#allocation3 + $0x10] sm:$0xff]
    %v218 = vld [vmem:[#allocation3 + $0x18] sm:$0xff]
    %v219 = vld [vmem:[#allocation3 + $0x20] sm:$0xff]
    %v220 = vld [vmem:[#allocation3 + $0x28] sm:$0xff]
    %v221 = vld [vmem:[#allocation3 + $0x30] sm:$0xff]
    %v222 = vld [vmem:[#allocation3 + $0x38] sm:$0xff]
    %v223 = vld [vmem:[#allocation3 + $0x40] sm:$0xff]
    %v224 = vld [vmem:[#allocation3 + $0x48] sm:$0xff]
    %v225 = vld [vmem:[#allocation3 + $0x50] sm:$0xff]
    %v226 = vld [vmem:[#allocation3 + $0x58] sm:$0xff]
    %v227 = vld [vmem:[#allocation3 + $0x60] sm:$0xff]
    %v228 = vld [vmem:[#allocation3 + $0x68] sm:$0xff]
    %v229 = vld [vmem:[#allocation3 + $0x70] sm:$0xff]
    %v230 = vld [vmem:[#allocation3 + $0x78] sm:$0xff]
    %v231 = vld [vmem:[#allocation3 + $0x80] sm:$0xff]
    %v232 = vld [vmem:[#allocation3 + $0x88] sm:$0xff]
    %v233 = vld [vmem:[#allocation3 + $0x90] sm:$0xff]
    %v234 = vld [vmem:[#allocation3 + $0x98] sm:$0xff]
    %v235 = vld [vmem:[#allocation3 + $0xa0] sm:$0xff]
    %v236 = vld [vmem:[#allocation3 + $0xa8] sm:$0xff]
    %v237 = vld [vmem:[#allocation3 + $0xb0] sm:$0xff]
    %v238 = vld [vmem:[#allocation3 + $0xb8] sm:$0xff]
    %v239 = vld [vmem:[#allocation3 + $0xc0] sm:$0xff]
    %v240 = vld [vmem:[#allocation3 + $0xc8] sm:$0xff]
    %v241 = vld [vmem:[#allocation3 + $0xd0] sm:$0xff]
    %v242 = vld [vmem:[#allocation3 + $0xd8] sm:$0xff]
    %v243 = vld [vmem:[#allocation3 + $0xe0] sm:$0xff]
    %v244 = vld [vmem:[#allocation3 + $0xe8] sm:$0xff]
    %v245 = vld [vmem:[#allocation3 + $0xf0] sm:$0xff]
    %v246 = vld [vmem:[#allocation3 + $0xf8] sm:$0xff]
    %v247 = vld [vmem:[#allocation3 + $0x100] sm:$0xff]
    %v248 = vld [vmem:[#allocation3 + $0x108] sm:$0xff]
    %v249 = vld [vmem:[#allocation3 + $0x110] sm:$0xff]
    %v250 = vld [vmem:[#allocation3 + $0x118] sm:$0xff]
    %v251 = vld [vmem:[#allocation3 + $0x120] sm:$0xff]
    %v252 = vld [vmem:[#allocation3 + $0x128] sm:$0xff]
    %v253 = vld [vmem:[#allocation3 + $0x130] sm:$0xff]
    %v254 = vld [vmem:[#allocation3 + $0x138] sm:$0xff]
    %v255 = vld [vmem:[#allocation3 + $0x140] sm:$0xff]
    %v256 = vld [vmem:[#allocation3 + $0x148] sm:$0xff]
    %v257 = vld [vmem:[#allocation3 + $0x150] sm:$0xff]
    %v258 = vld [vmem:[#allocation3 + $0x158] sm:$0xff]
    %v259 = vld [vmem:[#allocation3 + $0x160] sm:$0xff]
    %v260 = vld [vmem:[#allocation3 + $0x168] sm:$0xff]
    %v261 = vld [vmem:[#allocation3 + $0x170] sm:$0xff]
    %v262 = vld [vmem:[#allocation3 + $0x178] sm:$0xff]
    %v263 = vld [vmem:[#allocation3 + $0x180] sm:$0xff]
    %v264 = vld [vmem:[#allocation3 + $0x188] sm:$0xff]
    %v265 = vld [vmem:[#allocation3 + $0x190] sm:$0xff]
    %v266 = vld [vmem:[#allocation3 + $0x198] sm:$0xff]
    %v267 = vld [vmem:[#allocation3 + $0x1a0] sm:$0xff]
    %v268 = vld [vmem:[#allocation3 + $0x1a8] sm:$0xff]
    %v269 = vld [vmem:[#allocation3 + $0x1b0] sm:$0xff]
    %v270 = vld [vmem:[#allocation3 + $0x1b8] sm:$0xff]
    %v271 = vld [vmem:[#allocation3 + $0x1c0] sm:$0xff]
    %v272 = vld [vmem:[#allocation3 + $0x1c8] sm:$0xff]
    %v273 = vld [vmem:[#allocation3 + $0x1d0] sm:$0xff]
    %v274 = vld [vmem:[#allocation3 + $0x1d8] sm:$0xff]
    %v275 = vld [vmem:[#allocation3 + $0x1e0] sm:$0xff]
    %v276 = vld [vmem:[#allocation3 + $0x1e8] sm:$0xff]
    %v277 = vld [vmem:[#allocation3 + $0x1f0] sm:$0xff]
    %v278 = vld [vmem:[#allocation3 + $0x1f8] sm:$0xff]
    %v279 = vld [vmem:[%s4] sm:$0x3]
    %v281 = vlaneseq
    %v282 = vshrl.u32 %v281, 7
    %v283 = vsub.s32 0, %v282
    %v284 = vrot.slane %v279, %v283
    %v285 = vlaneseq
    %v286 = vshrl.u32 %v285, 7
    %v287 = vsub.s32 1, %v286
    %v288 = vrot.slane %v279, %v287
    %v355 = vunpack.c.l.b16 %v215
    %v356 = vunpack.c.h.b16 %v215
    %v357 = vunpack.c.l.b16 %v216
    %v358 = vunpack.c.h.b16 %v216
    %v359 = vunpack.c.l.b16 %v217
    %v360 = vunpack.c.h.b16 %v217
    %v361 = vunpack.c.l.b16 %v218
    %v362 = vunpack.c.h.b16 %v218
    %v363 = vunpack.c.l.b16 %v219
    %v364 = vunpack.c.h.b16 %v219
    %v365 = vunpack.c.l.b16 %v220
    %v366 = vunpack.c.h.b16 %v220
    %v367 = vunpack.c.l.b16 %v221
    %v368 = vunpack.c.h.b16 %v221
    %v369 = vunpack.c.l.b16 %v222
    %v370 = vunpack.c.h.b16 %v222
    %v371 = vunpack.c.l.b16 %v223
    %v372 = vunpack.c.h.b16 %v223
    %v373 = vunpack.c.l.b16 %v224
    %v374 = vunpack.c.h.b16 %v224
    %v375 = vunpack.c.l.b16 %v225
    %v376 = vunpack.c.h.b16 %v225
    %v377 = vunpack.c.l.b16 %v226
    %v378 = vunpack.c.h.b16 %v226
    %v379 = vunpack.c.l.b16 %v227
    %v380 = vunpack.c.h.b16 %v227
    %v381 = vunpack.c.l.b16 %v228
    %v382 = vunpack.c.h.b16 %v228
    %v383 = vunpack.c.l.b16 %v229
    %v384 = vunpack.c.h.b16 %v229
    %v385 = vunpack.c.l.b16 %v230
    %v386 = vunpack.c.h.b16 %v230
    %v387 = vunpack.c.l.b16 %v231
    %v388 = vunpack.c.h.b16 %v231
    %v389 = vunpack.c.l.b16 %v232
    %v390 = vunpack.c.h.b16 %v232
    %v391 = vunpack.c.l.b16 %v233
    %v392 = vunpack.c.h.b16 %v233
    %v393 = vunpack.c.l.b16 %v234
    %v394 = vunpack.c.h.b16 %v234
    %v395 = vunpack.c.l.b16 %v235
    %v396 = vunpack.c.h.b16 %v235
    %v397 = vunpack.c.l.b16 %v236
    %v398 = vunpack.c.h.b16 %v236
    %v399 = vunpack.c.l.b16 %v237
    %v400 = vunpack.c.h.b16 %v237
    %v401 = vunpack.c.l.b16 %v238
    %v402 = vunpack.c.h.b16 %v238
    %v403 = vunpack.c.l.b16 %v239
    %v404 = vunpack.c.h.b16 %v239
    %v405 = vunpack.c.l.b16 %v240
    %v406 = vunpack.c.h.b16 %v240
    %v407 = vunpack.c.l.b16 %v241
    %v408 = vunpack.c.h.b16 %v241
    %v409 = vunpack.c.l.b16 %v242
    %v410 = vunpack.c.h.b16 %v242
    %v411 = vunpack.c.l.b16 %v243
    %v412 = vunpack.c.h.b16 %v243
    %v413 = vunpack.c.l.b16 %v244
    %v414 = vunpack.c.h.b16 %v244
    %v415 = vunpack.c.l.b16 %v245
    %v416 = vunpack.c.h.b16 %v245
    %v417 = vunpack.c.l.b16 %v246
    %v418 = vunpack.c.h.b16 %v246
    %v419 = vunpack.c.l.b16 %v247
    %v420 = vunpack.c.h.b16 %v247
    %v421 = vunpack.c.l.b16 %v248
    %v422 = vunpack.c.h.b16 %v248
    %v423 = vunpack.c.l.b16 %v249
    %v424 = vunpack.c.h.b16 %v249
    %v425 = vunpack.c.l.b16 %v250
    %v426 = vunpack.c.h.b16 %v250
    %v427 = vunpack.c.l.b16 %v251
    %v428 = vunpack.c.h.b16 %v251
    %v429 = vunpack.c.l.b16 %v252
    %v430 = vunpack.c.h.b16 %v252
    %v431 = vunpack.c.l.b16 %v253
    %v432 = vunpack.c.h.b16 %v253
    %v433 = vunpack.c.l.b16 %v254
    %v434 = vunpack.c.h.b16 %v254
    %v435 = vunpack.c.l.b16 %v255
    %v436 = vunpack.c.h.b16 %v255
    %v437 = vunpack.c.l.b16 %v256
    %v438 = vunpack.c.h.b16 %v256
    %v439 = vunpack.c.l.b16 %v257
    %v440 = vunpack.c.h.b16 %v257
    %v441 = vunpack.c.l.b16 %v258
    %v442 = vunpack.c.h.b16 %v258
    %v443 = vunpack.c.l.b16 %v259
    %v444 = vunpack.c.h.b16 %v259
    %v445 = vunpack.c.l.b16 %v260
    %v446 = vunpack.c.h.b16 %v260
    %v447 = vunpack.c.l.b16 %v261
    %v448 = vunpack.c.h.b16 %v261
    %v449 = vunpack.c.l.b16 %v262
    %v450 = vunpack.c.h.b16 %v262
    %v451 = vunpack.c.l.b16 %v263
    %v452 = vunpack.c.h.b16 %v263
    %v453 = vunpack.c.l.b16 %v264
    %v454 = vunpack.c.h.b16 %v264
    %v455 = vunpack.c.l.b16 %v265
    %v456 = vunpack.c.h.b16 %v265
    %v457 = vunpack.c.l.b16 %v266
    %v458 = vunpack.c.h.b16 %v266
    %v459 = vunpack.c.l.b16 %v267
    %v460 = vunpack.c.h.b16 %v267
    %v461 = vunpack.c.l.b16 %v268
    %v462 = vunpack.c.h.b16 %v268
    %v463 = vunpack.c.l.b16 %v269
    %v464 = vunpack.c.h.b16 %v269
    %v465 = vunpack.c.l.b16 %v270
    %v466 = vunpack.c.h.b16 %v270
    %v467 = vunpack.c.l.b16 %v271
    %v468 = vunpack.c.h.b16 %v271
    %v469 = vunpack.c.l.b16 %v272
    %v470 = vunpack.c.h.b16 %v272
    %v471 = vunpack.c.l.b16 %v273
    %v472 = vunpack.c.h.b16 %v273
    %v473 = vunpack.c.l.b16 %v274
    %v474 = vunpack.c.h.b16 %v274
    %v475 = vunpack.c.l.b16 %v275
    %v476 = vunpack.c.h.b16 %v275
    %v477 = vunpack.c.l.b16 %v276
    %v478 = vunpack.c.h.b16 %v276
    %v479 = vunpack.c.l.b16 %v277
    %v480 = vunpack.c.h.b16 %v277
    %v481 = vunpack.c.l.b16 %v278
    %v482 = vunpack.c.h.b16 %v278
    %v483 = vpack.c.b16 %v357, %v355
    %v484 = vpack.c.b16 %v358, %v356
    %v485 = vpack.c.b16 %v361, %v359
    %v486 = vpack.c.b16 %v362, %v360
    %v487 = vpack.c.b16 %v365, %v363
    %v488 = vpack.c.b16 %v366, %v364
    %v489 = vpack.c.b16 %v369, %v367
    %v490 = vpack.c.b16 %v370, %v368
    %v491 = vpack.c.b16 %v373, %v371
    %v492 = vpack.c.b16 %v374, %v372
    %v493 = vpack.c.b16 %v377, %v375
    %v494 = vpack.c.b16 %v378, %v376
    %v495 = vpack.c.b16 %v381, %v379
    %v496 = vpack.c.b16 %v382, %v380
    %v497 = vpack.c.b16 %v385, %v383
    %v498 = vpack.c.b16 %v386, %v384
    %v499 = vpack.c.b16 %v389, %v387
    %v500 = vpack.c.b16 %v390, %v388
    %v501 = vpack.c.b16 %v393, %v391
    %v502 = vpack.c.b16 %v394, %v392
    %v503 = vpack.c.b16 %v397, %v395
    %v504 = vpack.c.b16 %v398, %v396
    %v505 = vpack.c.b16 %v401, %v399
    %v506 = vpack.c.b16 %v402, %v400
    %v507 = vpack.c.b16 %v405, %v403
    %v508 = vpack.c.b16 %v406, %v404
    %v509 = vpack.c.b16 %v409, %v407
    %v510 = vpack.c.b16 %v410, %v408
    %v511 = vpack.c.b16 %v413, %v411
    %v512 = vpack.c.b16 %v414, %v412
    %v513 = vpack.c.b16 %v417, %v415
    %v514 = vpack.c.b16 %v418, %v416
    %v515 = vpack.c.b16 %v421, %v419
    %v516 = vpack.c.b16 %v422, %v420
    %v517 = vpack.c.b16 %v425, %v423
    %v518 = vpack.c.b16 %v426, %v424
    %v519 = vpack.c.b16 %v429, %v427
    %v520 = vpack.c.b16 %v430, %v428
    %v521 = vpack.c.b16 %v433, %v431
    %v522 = vpack.c.b16 %v434, %v432
    %v523 = vpack.c.b16 %v437, %v435
    %v524 = vpack.c.b16 %v438, %v436
    %v525 = vpack.c.b16 %v441, %v439
    %v526 = vpack.c.b16 %v442, %v440
    %v527 = vpack.c.b16 %v445, %v443
    %v528 = vpack.c.b16 %v446, %v444
    %v529 = vpack.c.b16 %v449, %v447
    %v530 = vpack.c.b16 %v450, %v448
    %v531 = vpack.c.b16 %v453, %v451
    %v532 = vpack.c.b16 %v454, %v452
    %v533 = vpack.c.b16 %v457, %v455
    %v534 = vpack.c.b16 %v458, %v456
    %v535 = vpack.c.b16 %v461, %v459
    %v536 = vpack.c.b16 %v462, %v460
    %v537 = vpack.c.b16 %v465, %v463
    %v538 = vpack.c.b16 %v466, %v464
    %v539 = vpack.c.b16 %v469, %v467
    %v540 = vpack.c.b16 %v470, %v468
    %v541 = vpack.c.b16 %v473, %v471
    %v542 = vpack.c.b16 %v474, %v472
    %v543 = vpack.c.b16 %v477, %v475
    %v544 = vpack.c.b16 %v478, %v476
    %v545 = vpack.c.b16 %v481, %v479
    %v546 = vpack.c.b16 %v482, %v480
    %611 = vmatprep.subr.bf16.mxu0 %v498
    %612 = vmatpush1.bf16.msra.mxu0 %v497
    %613 = vmatprep.subr.bf16.mxu0 %v496
    %614 = vmatpush1.bf16.msra.mxu0 %v495
    %615 = vmatprep.subr.bf16.mxu0 %v494
    %616 = vmatpush1.bf16.msra.mxu0 %v493
    %617 = vmatprep.subr.bf16.mxu0 %v492
    %618 = vmatpush1.bf16.msra.mxu0 %v491
    %619 = vmatprep.subr.bf16.mxu0 %v490
    %620 = vmatpush1.bf16.msra.mxu0 %v489
    %621 = vmatprep.subr.bf16.mxu0 %v488
    %622 = vmatpush1.bf16.msra.mxu0 %v487
    %623 = vmatprep.subr.bf16.mxu0 %v486
    %624 = vmatpush1.bf16.msra.mxu0 %v485
    %625 = vmatprep.subr.bf16.mxu0 %v484
    %626 = vmatpush1.bf16.msra.mxu0 %v483
    %627 = vmatprep.subr.bf16.mxu0 %v514
    %628 = vmatpush2.bf16.msra.mxu0 %v513
    %629 = vmatprep.subr.bf16.mxu0 %v512
    %630 = vmatpush2.bf16.msra.mxu0 %v511
    %631 = vmatprep.subr.bf16.mxu0 %v510
    %632 = vmatpush2.bf16.msra.mxu0 %v509
    %633 = vmatprep.subr.bf16.mxu0 %v508
    %634 = vmatpush2.bf16.msra.mxu0 %v507
    %635 = vmatprep.subr.bf16.mxu0 %v506
    %636 = vmatpush2.bf16.msra.mxu0 %v505
    %637 = vmatprep.subr.bf16.mxu0 %v504
    %638 = vmatpush2.bf16.msra.mxu0 %v503
    %639 = vmatprep.subr.bf16.mxu0 %v502
    %640 = vmatpush2.bf16.msra.mxu0 %v501
    %641 = vmatprep.subr.bf16.mxu0 %v500
    %642 = vmatpush2.bf16.msra.mxu0 %v499
    %643 = vmatprep.mubr.bf16.mxu0 %v212
    %644 = vmatmul.mubr.bf16.gmra.mxu0 %v211
    %v645 = vpop.f32.mrf.mxu0
    %v646 = vadd.f32 %v284, %v645
    %v647 = vpop.f32.mrf.mxu0
    %v648 = vadd.f32 %v288, %v647
    %v649 = vpop.f32.mrf.mxu0
    %v650 = vpop.f32.mrf.mxu0
    %651 = vdwg.mxu0
    %652 = vmatprep.subr.bf16.mxu0 %v530
    %653 = vmatpush1.bf16.msra.mxu0 %v529
    %654 = vmatprep.subr.bf16.mxu0 %v528
    %655 = vmatpush1.bf16.msra.mxu0 %v527
    %656 = vmatprep.subr.bf16.mxu0 %v526
    %657 = vmatpush1.bf16.msra.mxu0 %v525
    %658 = vmatprep.subr.bf16.mxu0 %v524
    %659 = vmatpush1.bf16.msra.mxu0 %v523
    %660 = vmatprep.subr.bf16.mxu0 %v522
    %661 = vmatpush1.bf16.msra.mxu0 %v521
    %662 = vmatprep.subr.bf16.mxu0 %v520
    %663 = vmatpush1.bf16.msra.mxu0 %v519
    %664 = vmatprep.subr.bf16.mxu0 %v518
    %665 = vmatpush1.bf16.msra.mxu0 %v517
    %666 = vmatprep.subr.bf16.mxu0 %v516
    %667 = vmatpush1.bf16.msra.mxu0 %v515
    %668 = vmatprep.subr.bf16.mxu0 %v546
    %669 = vmatpush2.bf16.msra.mxu0 %v545
    %670 = vmatprep.subr.bf16.mxu0 %v544
    %671 = vmatpush2.bf16.msra.mxu0 %v543
    %672 = vmatprep.subr.bf16.mxu0 %v542
    %673 = vmatpush2.bf16.msra.mxu0 %v541
    %674 = vmatprep.subr.bf16.mxu0 %v540
    %675 = vmatpush2.bf16.msra.mxu0 %v539
    %676 = vmatprep.subr.bf16.mxu0 %v538
    %677 = vmatpush2.bf16.msra.mxu0 %v537
    %678 = vmatprep.subr.bf16.mxu0 %v536
    %679 = vmatpush2.bf16.msra.mxu0 %v535
    %680 = vmatprep.subr.bf16.mxu0 %v534
    %681 = vmatpush2.bf16.msra.mxu0 %v533
    %682 = vmatprep.subr.bf16.mxu0 %v532
    %683 = vmatpush2.bf16.msra.mxu0 %v531
    %684 = vmatprep.mubr.bf16.mxu0 %v214
    %685 = vmatmul.mubr.bf16.gmra.mxu0 %v213
    %v686 = vpop.f32.mrf.mxu0
    %v687 = vadd.f32 %v646, %v686
    %v688 = vpop.f32.mrf.mxu0
    %v689 = vadd.f32 %v648, %v688
    %v690 = vpop.f32.mrf.mxu0
    %v691 = vpop.f32.mrf.mxu0
    %692 = vdwg.mxu0
    %v693 = vmax.f32 %v687, 0.0
    %v694 = vmax.f32 %v689, 0.0
    %v695 = vpack.c.bf16 %v693, %v693
    %v696 = vpack.c.bf16 %v694, %v694
    %v697 = vld [vmem:[%s5] sm:$0xf]
    %v698 = vld [vmem:[%s5 + $0x4] sm:$0xf]
    %v699 = vld [vmem:[%s5 + $0x8] sm:$0xf]
    %v700 = vld [vmem:[%s5 + $0xc] sm:$0xf]
    %v701 = vld [vmem:[%s5 + $0x10] sm:$0xf]
    %v702 = vld [vmem:[%s5 + $0x14] sm:$0xf]
    %v703 = vld [vmem:[%s5 + $0x18] sm:$0xf]
    %v704 = vld [vmem:[%s5 + $0x1c] sm:$0xf]
    %v705 = vld [vmem:[%s5 + $0x20] sm:$0xf]
    %v706 = vld [vmem:[%s5 + $0x24] sm:$0xf]
    %v707 = vld [vmem:[%s5 + $0x28] sm:$0xf]
    %v708 = vld [vmem:[%s5 + $0x2c] sm:$0xf]
    %v709 = vld [vmem:[%s5 + $0x30] sm:$0xf]
    %v710 = vld [vmem:[%s5 + $0x34] sm:$0xf]
    %v711 = vld [vmem:[%s5 + $0x38] sm:$0xf]
    %v712 = vld [vmem:[%s5 + $0x3c] sm:$0xf]
    %v713 = vld [vmem:[%s5 + $0x40] sm:$0xf]
    %v714 = vld [vmem:[%s5 + $0x44] sm:$0xf]
    %v715 = vld [vmem:[%s5 + $0x48] sm:$0xf]
    %v716 = vld [vmem:[%s5 + $0x4c] sm:$0xf]
    %v717 = vld [vmem:[%s5 + $0x50] sm:$0xf]
    %v718 = vld [vmem:[%s5 + $0x54] sm:$0xf]
    %v719 = vld [vmem:[%s5 + $0x58] sm:$0xf]
    %v720 = vld [vmem:[%s5 + $0x5c] sm:$0xf]
    %v721 = vld [vmem:[%s5 + $0x60] sm:$0xf]
    %v722 = vld [vmem:[%s5 + $0x64] sm:$0xf]
    %v723 = vld [vmem:[%s5 + $0x68] sm:$0xf]
    %v724 = vld [vmem:[%s5 + $0x6c] sm:$0xf]
    %v725 = vld [vmem:[%s5 + $0x70] sm:$0xf]
    %v726 = vld [vmem:[%s5 + $0x74] sm:$0xf]
    %v727 = vld [vmem:[%s5 + $0x78] sm:$0xf]
    %v728 = vld [vmem:[%s5 + $0x7c] sm:$0xf]
    %v729 = vld [vmem:[%s6] sm:$0x1]
    %v731 = vlaneseq
    %v732 = vshrl.u32 %v731, 7
    %v733 = vsub.s32 0, %v732
    %v734 = vrot.slane %v729, %v733
    %v768 = vunpack.c.l.b16 %v697
    %v769 = vunpack.c.l.b16 %v698
    %v770 = vunpack.c.l.b16 %v699
    %v771 = vunpack.c.l.b16 %v700
    %v772 = vunpack.c.l.b16 %v701
    %v773 = vunpack.c.l.b16 %v702
    %v774 = vunpack.c.l.b16 %v703
    %v775 = vunpack.c.l.b16 %v704
    %v776 = vunpack.c.l.b16 %v705
    %v777 = vunpack.c.l.b16 %v706
    %v778 = vunpack.c.l.b16 %v707
    %v779 = vunpack.c.l.b16 %v708
    %v780 = vunpack.c.l.b16 %v709
    %v781 = vunpack.c.l.b16 %v710
    %v782 = vunpack.c.l.b16 %v711
    %v783 = vunpack.c.l.b16 %v712
    %v784 = vunpack.c.l.b16 %v713
    %v785 = vunpack.c.l.b16 %v714
    %v786 = vunpack.c.l.b16 %v715
    %v787 = vunpack.c.l.b16 %v716
    %v788 = vunpack.c.l.b16 %v717
    %v789 = vunpack.c.l.b16 %v718
    %v790 = vunpack.c.l.b16 %v719
    %v791 = vunpack.c.l.b16 %v720
    %v792 = vunpack.c.l.b16 %v721
    %v793 = vunpack.c.l.b16 %v722
    %v794 = vunpack.c.l.b16 %v723
    %v795 = vunpack.c.l.b16 %v724
    %v796 = vunpack.c.l.b16 %v725
    %v797 = vunpack.c.l.b16 %v726
    %v798 = vunpack.c.l.b16 %v727
    %v799 = vunpack.c.l.b16 %v728
    %v800 = vpack.c.b16 %v769, %v768
    %v801 = vpack.c.b16 %v771, %v770
    %v802 = vpack.c.b16 %v773, %v772
    %v803 = vpack.c.b16 %v775, %v774
    %v804 = vpack.c.b16 %v777, %v776
    %v805 = vpack.c.b16 %v779, %v778
    %v806 = vpack.c.b16 %v781, %v780
    %v807 = vpack.c.b16 %v783, %v782
    %v808 = vpack.c.b16 %v785, %v784
    %v809 = vpack.c.b16 %v787, %v786
    %v810 = vpack.c.b16 %v789, %v788
    %v811 = vpack.c.b16 %v791, %v790
    %v812 = vpack.c.b16 %v793, %v792
    %v813 = vpack.c.b16 %v795, %v794
    %v814 = vpack.c.b16 %v797, %v796
    %v815 = vpack.c.b16 %v799, %v798
    %832 = vmatprep.subr.bf16.mxu0 0
    %833 = vmatpush1.bf16.msra.mxu0 %v807
    %834 = vmatprep.subr.bf16.mxu0 0
    %835 = vmatpush1.bf16.msra.mxu0 %v806
    %836 = vmatprep.subr.bf16.mxu0 0
    %837 = vmatpush1.bf16.msra.mxu0 %v805
    %838 = vmatprep.subr.bf16.mxu0 0
    %839 = vmatpush1.bf16.msra.mxu0 %v804
    %840 = vmatprep.subr.bf16.mxu0 0
    %841 = vmatpush1.bf16.msra.mxu0 %v803
    %842 = vmatprep.subr.bf16.mxu0 0
    %843 = vmatpush1.bf16.msra.mxu0 %v802
    %844 = vmatprep.subr.bf16.mxu0 0
    %845 = vmatpush1.bf16.msra.mxu0 %v801
    %846 = vmatprep.subr.bf16.mxu0 0
    %847 = vmatpush1.bf16.msra.mxu0 %v800
    %848 = vmatprep.subr.bf16.mxu0 0
    %849 = vmatpush2.bf16.msra.mxu0 %v815
    %850 = vmatprep.subr.bf16.mxu0 0
    %851 = vmatpush2.bf16.msra.mxu0 %v814
    %852 = vmatprep.subr.bf16.mxu0 0
    %853 = vmatpush2.bf16.msra.mxu0 %v813
    %854 = vmatprep.subr.bf16.mxu0 0
    %855 = vmatpush2.bf16.msra.mxu0 %v812
    %856 = vmatprep.subr.bf16.mxu0 0
    %857 = vmatpush2.bf16.msra.mxu0 %v811
    %858 = vmatprep.subr.bf16.mxu0 0
    %859 = vmatpush2.bf16.msra.mxu0 %v810
    %860 = vmatprep.subr.bf16.mxu0 0
    %861 = vmatpush2.bf16.msra.mxu0 %v809
    %862 = vmatprep.subr.bf16.mxu0 0
    %863 = vmatpush2.bf16.msra.mxu0 %v808
    %864 = vmatprep.mubr.bf16.mxu0 %v696
    %865 = vmatmul.mubr.bf16.gmra.mxu0 %v695
    %v866 = vpop.f32.mrf.mxu0
    %v867 = vadd.f32 %v734, %v866
    %v868 = vpop.f32.mrf.mxu0
    %v869 = vpop.f32.mrf.mxu0
    %v870 = vpop.f32.mrf.mxu0
    %871 = vdwg.mxu0
    %v872 = vmax.f32 %v867, 0.0
    %v873 = vld [vmem:[%s7] sm:$0x1]
    %v875 = vlaneseq
    %v876 = vshrl.u32 %v875, 7
    %v877 = vsub.s32 0, %v876
    %v878 = vrot.slane %v873, %v877
    %v880 = vmul.f32 %v872, %v878
    %v881 = vsel %vm121, %v880, 0.0
    %882 = vadd.xlane.f32.xlu0 %v881
    %v883 = vpop.xlane.xlu0 %882
    %v884 = vld [vmem:[#allocation2] sm:$0x1]
    %v886 = vlaneseq
    %v887 = vshrl.u32 %v886, 7
    %v888 = vsub.s32 0, %v887
    %v889 = vrot.slane %v884, %v888
    %v891 = vadd.f32 %v883, %v889
    %vm892 = vcmask 7168
    %893 = vst.msk [vmem:[%s9] sm:$0xff] %vm892, %v891
    // Predicated region
    $region42: #{tpu_custom_call.1} parent=1 // pred_check
      _
    $region43: #{tpu_custom_call.1} parent=1 // pred_check_branch
      %895 = sbr.rel (0) target = $region45
    $region44: #{tpu_custom_call.1} parent=1 // pred_region
      _
    $region45: #{tpu_custom_call.1} parent=1 // pred_fallthru
      _
    // Predicated region
    $region46: #{tpu_custom_call.1} parent=1 // pred_check
      _
    $region47: #{tpu_custom_call.1} parent=1 // pred_check_branch
      %897 = sbr.rel (0) target = $region49
    $region48: #{tpu_custom_call.1} parent=1 // pred_region
      _
    $region49: #{tpu_custom_call.1} parent=1 // pred_fallthru
      _
    %898 = vsyncpa [#allocation4], 1

</llo_original>
